<compile_context>
chip_gen: v7x
topology: tpu7x:2x2x1
jax: 0.10.0
libtpu: 0.0.40
codegen_flags: <defaults>
</compile_context>

<pallas_src>
import math

import jax
import jax.numpy as jnp
from jax.experimental import pallas as pl
from jax.experimental.pallas import tpu as pltpu

LANE = 128
SUBLANE = 8


def _round_up(x, m):
    return ((x + m - 1) // m) * m


def _cdiv(a, b):
    return (a + b - 1) // b


def _detect_num_tensorcores():
    """Best-effort TensorCore-per-chip count (2 on v7x).  Only used to pick the
    number of batch tiles; any failure falls back to 1 (previous behavior)."""
    try:
        info = pltpu.get_tpu_info()
    except Exception:
        return 1
    for name in ("num_cores", "num_tensorcores", "tensorcores_per_chip",
                 "cores_per_chip", "core_count", "num_tensor_cores"):
        v = getattr(info, name, None)
        if isinstance(v, int) and v >= 1:
            return min(v, 2)
    return 1


# ----------------------------- Pallas kernel -------------------------------

def q2_kernel(state_ref, action_ref, w1s_ref, w1a_ref, w_ref, b_ref, out_ref):
    # Fused concat: first-layer weight is split along its input dim, so the
    # concat becomes a sum of two partial matmuls (bf16 operands, f32 acc).
    h = (jnp.dot(state_ref[...], w1s_ref[...], preferred_element_type=jnp.float32)
         + jnp.dot(action_ref[...], w1a_ref[...], preferred_element_type=jnp.float32)
         + b_ref[0:1, :])
    h = jnp.maximum(h, 0.0)

    # Three residual blocks: relu(h @ W + b + h).  bf16 MXU operands, f32 acc;
    # bias / residual add / ReLU kept in f32 (v5e VPU has no bf16 ALU).
    for l in range(3):
        f = (jnp.dot(h.astype(jnp.bfloat16), w_ref[l],
                     preferred_element_type=jnp.float32)
             + b_ref[l + 1:l + 2, :] + h)
        h = jnp.maximum(f, 0.0)

    # Output head: one lane-padded matmul (wo padded to 128 cols with zeros),
    # then store only the real output columns -> tiny HBM write per row.
    head = (jnp.dot(h.astype(jnp.bfloat16), w_ref[3],
                    preferred_element_type=jnp.float32)
            + b_ref[4:5, :])
    n_out = out_ref.shape[-1]
    out_ref[...] = head[:, :n_out].astype(out_ref.dtype)


# ------------------------------ host wrapper --------------------------------

def q2_forward(state, action, kparams, n_output, *, batch_tile=512):
    """Full Q2 forward in one pallas_call with a batch grid. Returns squeeze(q)."""
    # bf16 inputs: matmul operands are bf16 anyway; halves input HBM traffic.
    state = state.astype(jnp.bfloat16)
    action = action.astype(jnp.bfloat16)
    B, n_state = state.shape
    _, n_action = action.shape

    F_pad = kparams["w1s"].shape[1]            # 128-lane padded hidden width

    # --- batch tiling: no near-empty padded tiles, >=2 tiles on 2-TC chips ---
    n_cores = _detect_num_tensorcores()
    num_tiles = max(_cdiv(B, batch_tile), 1)
    if n_cores > 1:
        num_tiles = max(num_tiles, min(n_cores, _cdiv(B, SUBLANE)))
    TB = _round_up(_cdiv(B, num_tiles), SUBLANE)
    num_tiles = _cdiv(B, TB)
    B_pad = TB * num_tiles

    if B_pad != B:
        pad = B_pad - B
        state = jnp.pad(state, ((0, pad), (0, 0)))
        action = jnp.pad(action, ((0, pad), (0, 0)))

    def resident_spec(arr):
        # Constant block index -> DMA'd once, stays VMEM-resident; single buffer.
        idx = lambda i, _nd=arr.ndim: (0,) * _nd
        try:
            return pl.BlockSpec(arr.shape, idx, pipeline_mode=pl.Buffered(1))
        except Exception:  # older jax without pipeline_mode/Buffered support
            return pl.BlockSpec(arr.shape, idx)

    in_specs = [
        pl.BlockSpec((TB, n_state), lambda i: (i, 0)),
        pl.BlockSpec((TB, n_action), lambda i: (i, 0)),
        resident_spec(kparams["w1s"]),
        resident_spec(kparams["w1a"]),
        resident_spec(kparams["w_stack"]),
        resident_spec(kparams["b_stack"]),
    ]
    out_specs = pl.BlockSpec((TB, n_output), lambda i: (i, 0))

    flops = 2 * B_pad * ((n_state + n_action) * F_pad + 4 * F_pad * F_pad)
    bytes_accessed = (
        int(state.size) * 2 + int(action.size) * 2
        + sum(int(v.size) * v.dtype.itemsize for v in kparams.values())
        + B_pad * n_output * 4)

    q = pl.pallas_call(
        q2_kernel,
        out_shape=jax.ShapeDtypeStruct((B_pad, n_output), jnp.float32),
        grid=(num_tiles,),
        in_specs=in_specs,
        out_specs=out_specs,
        compiler_params=pltpu.CompilerParams(
            dimension_semantics=("parallel",)),   # shards batch tiles on v7x's 2 TCs
        cost_estimate=pl.CostEstimate(
            flops=int(flops), transcendentals=0,
            bytes_accessed=int(bytes_accessed)),
    )(state, action, kparams["w1s"], kparams["w1a"],
      kparams["w_stack"], kparams["b_stack"])

    # torch.squeeze removes all size-1 dims
    return jnp.squeeze(q[:B])


# ------------------------- deterministic parameters -------------------------

def xavier_uniform(key, fan_in, fan_out, gain):
    bound = gain * math.sqrt(6.0 / (fan_in + fan_out))
    # stored as (in, out), i.e. transposed vs. PyTorch's (out, in)
    return jax.random.uniform(key, (fan_in, fan_out), jnp.float32, -bound, bound)


def linear_bias(key, fan_in, fan_out):
    # PyTorch nn.Linear default bias init: U(-1/sqrt(fan_in), 1/sqrt(fan_in))
    bound = 1.0 / math.sqrt(fan_in)
    return jax.random.uniform(key, (1, fan_out), jnp.float32, -bound, bound)


def init_params(key, n_input, n_features, n_output):
    ks = jax.random.split(key, 10)
    gain_relu = math.sqrt(2.0)
    gain_lin = 1.0
    return {
        "w1":  xavier_uniform(ks[0], n_input, n_features, gain_relu),
        "b1":  linear_bias(ks[1], n_input, n_features),
        "wr0": xavier_uniform(ks[2], n_features, n_features, gain_lin),
        "br0": linear_bias(ks[3], n_features, n_features),
        "wr1": xavier_uniform(ks[4], n_features, n_features, gain_lin),
        "br1": linear_bias(ks[5], n_features, n_features),
        "wr2": xavier_uniform(ks[6], n_features, n_features, gain_lin),
        "br2": linear_bias(ks[7], n_features, n_features),
        "wo":  xavier_uniform(ks[8], n_features, n_output, gain_lin),
        "bo":  linear_bias(ks[9], n_features, n_output),
    }


def prepare_kernel_params(params, n_state, n_features, n_output):
    """Split w1, zero-pad to 128 lanes, stack residual/head weights and biases.

    Returns:
      w1s:     (n_state,  F_pad)    bf16
      w1a:     (n_action, F_pad)    bf16
      w_stack: (4, F_pad, F_pad)    bf16   [wr0, wr1, wr2, wo(padded)]
      b_stack: (5, F_pad)           f32    [b1, br0, br1, br2, bo(padded)]
    """
    F_pad = _round_up(n_features, LANE)
    assert n_output <= F_pad, "output head wider than padded feature width"

    def pad_to(w, rows, cols):
        return jnp.pad(w, ((0, rows - w.shape[0]), (0, cols - w.shape[1])))

    w1 = params["w1"]
    n_action = w1.shape[0] - n_state
    w1s = pad_to(w1[:n_state], n_state, F_pad).astype(jnp.bfloat16)
    w1a = pad_to(w1[n_state:], n_action, F_pad).astype(jnp.bfloat16)
    w_stack = jnp.stack([
        pad_to(params["wr0"], F_pad, F_pad),
        pad_to(params["wr1"], F_pad, F_pad),
        pad_to(params["wr2"], F_pad, F_pad),
        pad_to(params["wo"],  F_pad, F_pad),
    ], axis=0).astype(jnp.bfloat16)
    b_stack = jnp.concatenate([
        pad_to(params["b1"],  1, F_pad),
        pad_to(params["br0"], 1, F_pad),
        pad_to(params["br1"], 1, F_pad),
        pad_to(params["br2"], 1, F_pad),
        pad_to(params["bo"],  1, F_pad),
    ], axis=0).astype(jnp.float32)
    return {"w1s": w1s, "w1a": w1a, "w_stack": w_stack, "b_stack": b_stack}


# ---------------------------------- main ------------------------------------

if __name__ == "__main__":
    B = 8
    n_state = 12
    n_action = 4
    n_input = n_state + n_action   # input_shape[-1] after concat
    n_features = 32
    n_output = 1                   # output_shape[0]

    key = jax.random.PRNGKey(0)
    k_s, k_a, k_p = jax.random.split(key, 3)
    state = jax.random.normal(k_s, (B, n_state), jnp.float32)
    action = jax.random.normal(k_a, (B, n_action), jnp.float32)
    params = init_params(k_p, n_input, n_features, n_output)
    kparams = prepare_kernel_params(params, n_state, n_features, n_output)

    q = q2_forward(state, action, kparams, n_output)
    jax.block_until_ready(q)
    assert q.shape == (B,), q.shape

    # reference matching the kernel's bf16-operand / f32-accumulate matmuls
    def bdot(x, w):
        return jnp.dot(x.astype(jnp.bfloat16), w.astype(jnp.bfloat16),
                       preferred_element_type=jnp.float32)

    def ref_forward_bf16(state, action, p):
        x = jnp.concatenate([state, action], axis=1)
        h = jax.nn.relu(bdot(x, p["w1"]) + p["b1"])
        for w, b in ((p["wr0"], p["br0"]), (p["wr1"], p["br1"]),
                     (p["wr2"], p["br2"])):
            h = jax.nn.relu(bdot(h, w) + b + h)
        return jnp.squeeze(bdot(h, p["wo"]) + p["bo"])

    # pure-f32 reference (module semantics); looser tolerance due to bf16 weights
    def ref_forward_f32(state, action, p):
        x = jnp.concatenate([state, action], axis=1)
        h = jax.nn.relu(x @ p["w1"] + p["b1"])
        for w, b in ((p["wr0"], p["br0"]), (p["wr1"], p["br1"]),
                     (p["wr2"], p["br2"])):
            h = jax.nn.relu(h @ w + b + h)
        return jnp.squeeze(h @ p["wo"] + p["bo"])

    ref_b = ref_forward_bf16(state, action, params)
    ref_f = ref_forward_f32(state, action, params)
    assert jnp.allclose(q, ref_b, atol=2e-3, rtol=2e-3), (q, ref_b)
    assert jnp.allclose(q, ref_f, atol=1e-1, rtol=1e-1), (q, ref_f)

    print("KERNEL_OK")
</pallas_src>

<mosaic_0001>
module attributes {stable_mosaic.version = 11 : i64} {
  func.func @q2_kernel(%arg0: i32, %arg1: memref<8x12xbf16, #tpu.memory_space<vmem>>, %arg2: memref<8x4xbf16, #tpu.memory_space<vmem>>, %arg3: memref<12x128xbf16, #tpu.memory_space<vmem>>, %arg4: memref<4x128xbf16, #tpu.memory_space<vmem>>, %arg5: memref<4x128x128xbf16, #tpu.memory_space<vmem>>, %arg6: memref<5x128xf32, #tpu.memory_space<vmem>>, %arg7: memref<8x1xf32, #tpu.memory_space<vmem>>) attributes {dimension_semantics = [#tpu.dimension_semantics<parallel>], iteration_bounds = array<i64: 1>, scalar_prefetch = 0 : i64, scratch_operands = 0 : i64, tpu.core_type = #tpu.core_type<tc>, window_params = [{transform_indices = @transform_0, window_bounds = array<i64: 8, 12>}, {transform_indices = @transform_1, window_bounds = array<i64: 8, 4>}, {pipeline_mode = #tpu.pipeline_mode<synchronous>, transform_indices = @transform_2, window_bounds = array<i64: 12, 128>}, {pipeline_mode = #tpu.pipeline_mode<synchronous>, transform_indices = @transform_3, window_bounds = array<i64: 4, 128>}, {pipeline_mode = #tpu.pipeline_mode<synchronous>, transform_indices = @transform_4, window_bounds = array<i64: 4, 128, 128>}, {pipeline_mode = #tpu.pipeline_mode<synchronous>, transform_indices = @transform_5, window_bounds = array<i64: 5, 128>}, {transform_indices = @transform_6, window_bounds = array<i64: 8, 1>}]} {
    %c0 = arith.constant 0 : index
    %c0_0 = arith.constant 0 : index
    %0 = vector.load %arg1[%c0, %c0_0] : memref<8x12xbf16, #tpu.memory_space<vmem>>, vector<8x12xbf16>
    %c0_1 = arith.constant 0 : index
    %c0_2 = arith.constant 0 : index
    %1 = vector.load %arg3[%c0_1, %c0_2] : memref<12x128xbf16, #tpu.memory_space<vmem>>, vector<12x128xbf16>
    %cst = arith.constant dense<0.000000e+00> : vector<8x128xf32>
    %2 = tpu.matmul %0, %1, %cst {dimension_numbers = #tpu.dot_dimension_numbers<[1], [0], [0], [1], [0, 0, 1, 1], [], []>} : vector<8x12xbf16>, vector<12x128xbf16>, vector<8x128xf32> -> vector<8x128xf32>
    %c0_3 = arith.constant 0 : index
    %c0_4 = arith.constant 0 : index
    %3 = vector.load %arg2[%c0_3, %c0_4] : memref<8x4xbf16, #tpu.memory_space<vmem>>, vector<8x4xbf16>
    %c0_5 = arith.constant 0 : index
    %c0_6 = arith.constant 0 : index
    %4 = vector.load %arg4[%c0_5, %c0_6] : memref<4x128xbf16, #tpu.memory_space<vmem>>, vector<4x128xbf16>
    %cst_7 = arith.constant dense<0.000000e+00> : vector<8x128xf32>
    %5 = tpu.matmul %3, %4, %cst_7 {dimension_numbers = #tpu.dot_dimension_numbers<[1], [0], [0], [1], [0, 0, 1, 1], [], []>} : vector<8x4xbf16>, vector<4x128xbf16>, vector<8x128xf32> -> vector<8x128xf32>
    %6 = arith.addf %2, %5 : vector<8x128xf32>
    %c0_8 = arith.constant 0 : index
    %c0_9 = arith.constant 0 : index
    %7 = vector.load %arg6[%c0_8, %c0_9] : memref<5x128xf32, #tpu.memory_space<vmem>>, vector<1x128xf32>
    %8 = vector.broadcast %7 : vector<1x128xf32> to vector<8x128xf32>
    %9 = arith.addf %6, %8 : vector<8x128xf32>
    %cst_10 = arith.constant 0.000000e+00 : f32
    %10 = vector.broadcast %cst_10 : f32 to vector<8x128xf32>
    %11 = arith.maximumf %9, %10 : vector<8x128xf32>
    %12 = arith.truncf %11 : vector<8x128xf32> to vector<8x128xbf16>
    %c0_11 = arith.constant 0 : index
    %c0_12 = arith.constant 0 : index
    %c0_13 = arith.constant 0 : index
    %13 = vector.load %arg5[%c0_11, %c0_12, %c0_13] : memref<4x128x128xbf16, #tpu.memory_space<vmem>>, vector<1x128x128xbf16>
    %14 = vector.shape_cast %13 : vector<1x128x128xbf16> to vector<128x128xbf16>
    %cst_14 = arith.constant dense<0.000000e+00> : vector<8x128xf32>
    %15 = tpu.matmul %12, %14, %cst_14 {dimension_numbers = #tpu.dot_dimension_numbers<[1], [0], [0], [1], [0, 0, 1, 1], [], []>} : vector<8x128xbf16>, vector<128x128xbf16>, vector<8x128xf32> -> vector<8x128xf32>
    %c1 = arith.constant 1 : index
    %c0_15 = arith.constant 0 : index
    %16 = vector.load %arg6[%c1, %c0_15] : memref<5x128xf32, #tpu.memory_space<vmem>>, vector<1x128xf32>
    %17 = vector.broadcast %16 : vector<1x128xf32> to vector<8x128xf32>
    %18 = arith.addf %15, %17 : vector<8x128xf32>
    %19 = arith.addf %18, %11 : vector<8x128xf32>
    %cst_16 = arith.constant 0.000000e+00 : f32
    %20 = vector.broadcast %cst_16 : f32 to vector<8x128xf32>
    %21 = arith.maximumf %19, %20 : vector<8x128xf32>
    %22 = arith.truncf %21 : vector<8x128xf32> to vector<8x128xbf16>
    %c1_17 = arith.constant 1 : index
    %c0_18 = arith.constant 0 : index
    %c0_19 = arith.constant 0 : index
    %23 = vector.load %arg5[%c1_17, %c0_18, %c0_19] : memref<4x128x128xbf16, #tpu.memory_space<vmem>>, vector<1x128x128xbf16>
    %24 = vector.shape_cast %23 : vector<1x128x128xbf16> to vector<128x128xbf16>
    %cst_20 = arith.constant dense<0.000000e+00> : vector<8x128xf32>
    %25 = tpu.matmul %22, %24, %cst_20 {dimension_numbers = #tpu.dot_dimension_numbers<[1], [0], [0], [1], [0, 0, 1, 1], [], []>} : vector<8x128xbf16>, vector<128x128xbf16>, vector<8x128xf32> -> vector<8x128xf32>
    %c2 = arith.constant 2 : index
    %c0_21 = arith.constant 0 : index
    %26 = vector.load %arg6[%c2, %c0_21] : memref<5x128xf32, #tpu.memory_space<vmem>>, vector<1x128xf32>
    %27 = vector.broadcast %26 : vector<1x128xf32> to vector<8x128xf32>
    %28 = arith.addf %25, %27 : vector<8x128xf32>
    %29 = arith.addf %28, %21 : vector<8x128xf32>
    %cst_22 = arith.constant 0.000000e+00 : f32
    %30 = vector.broadcast %cst_22 : f32 to vector<8x128xf32>
    %31 = arith.maximumf %29, %30 : vector<8x128xf32>
    %32 = arith.truncf %31 : vector<8x128xf32> to vector<8x128xbf16>
    %c2_23 = arith.constant 2 : index
    %c0_24 = arith.constant 0 : index
    %c0_25 = arith.constant 0 : index
    %33 = vector.load %arg5[%c2_23, %c0_24, %c0_25] : memref<4x128x128xbf16, #tpu.memory_space<vmem>>, vector<1x128x128xbf16>
    %34 = vector.shape_cast %33 : vector<1x128x128xbf16> to vector<128x128xbf16>
    %cst_26 = arith.constant dense<0.000000e+00> : vector<8x128xf32>
    %35 = tpu.matmul %32, %34, %cst_26 {dimension_numbers = #tpu.dot_dimension_numbers<[1], [0], [0], [1], [0, 0, 1, 1], [], []>} : vector<8x128xbf16>, vector<128x128xbf16>, vector<8x128xf32> -> vector<8x128xf32>
    %c3 = arith.constant 3 : index
    %c0_27 = arith.constant 0 : index
    %36 = vector.load %arg6[%c3, %c0_27] : memref<5x128xf32, #tpu.memory_space<vmem>>, vector<1x128xf32>
    %37 = vector.broadcast %36 : vector<1x128xf32> to vector<8x128xf32>
    %38 = arith.addf %35, %37 : vector<8x128xf32>
    %39 = arith.addf %38, %31 : vector<8x128xf32>
    %cst_28 = arith.constant 0.000000e+00 : f32
    %40 = vector.broadcast %cst_28 : f32 to vector<8x128xf32>
    %41 = arith.maximumf %39, %40 : vector<8x128xf32>
    %42 = arith.truncf %41 : vector<8x128xf32> to vector<8x128xbf16>
    %c3_29 = arith.constant 3 : index
    %c0_30 = arith.constant 0 : index
    %c0_31 = arith.constant 0 : index
    %43 = vector.load %arg5[%c3_29, %c0_30, %c0_31] : memref<4x128x128xbf16, #tpu.memory_space<vmem>>, vector<1x128x128xbf16>
    %44 = vector.shape_cast %43 : vector<1x128x128xbf16> to vector<128x128xbf16>
    %cst_32 = arith.constant dense<0.000000e+00> : vector<8x128xf32>
    %45 = tpu.matmul %42, %44, %cst_32 {dimension_numbers = #tpu.dot_dimension_numbers<[1], [0], [0], [1], [0, 0, 1, 1], [], []>} : vector<8x128xbf16>, vector<128x128xbf16>, vector<8x128xf32> -> vector<8x128xf32>
    %c4 = arith.constant 4 : index
    %c0_33 = arith.constant 0 : index
    %46 = vector.load %arg6[%c4, %c0_33] : memref<5x128xf32, #tpu.memory_space<vmem>>, vector<1x128xf32>
    %47 = vector.broadcast %46 : vector<1x128xf32> to vector<8x128xf32>
    %48 = arith.addf %45, %47 : vector<8x128xf32>
    %49 = vector.extract_strided_slice %48 {offsets = [0, 0], sizes = [8, 1], strides = [1, 1]} : vector<8x128xf32> to vector<8x1xf32>
    %c0_34 = arith.constant 0 : index
    %c0_35 = arith.constant 0 : index
    %50 = vector.load %arg7[%c0_34, %c0_35] : memref<8x1xf32, #tpu.memory_space<vmem>>, vector<8x1xf32>
    tpu.vector_store %arg7[%c0_34, %c0_35], %49 {strides = array<i32>} : memref<8x1xf32, #tpu.memory_space<vmem>>, vector<8x1xf32>,
    return
  }
  func.func @transform_0(%arg0: i32) -> (i32, i32) {
    %c0_i32 = arith.constant 0 : i32
    %c0_i32_0 = arith.constant 0 : i32
    return %arg0, %c0_i32 : i32, i32
  }
  func.func @transform_1(%arg0: i32) -> (i32, i32) {
    %c0_i32 = arith.constant 0 : i32
    %c0_i32_0 = arith.constant 0 : i32
    return %arg0, %c0_i32 : i32, i32
  }
  func.func @transform_2(%arg0: i32) -> (i32, i32) {
    %c0_i32 = arith.constant 0 : i32
    %c0_i32_0 = arith.constant 0 : i32
    %c0_i32_1 = arith.constant 0 : i32
    return %c0_i32, %c0_i32_0 : i32, i32
  }
  func.func @transform_3(%arg0: i32) -> (i32, i32) {
    %c0_i32 = arith.constant 0 : i32
    %c0_i32_0 = arith.constant 0 : i32
    %c0_i32_1 = arith.constant 0 : i32
    return %c0_i32, %c0_i32_0 : i32, i32
  }
  func.func @transform_4(%arg0: i32) -> (i32, i32, i32) {
    %c0_i32 = arith.constant 0 : i32
    %c0_i32_0 = arith.constant 0 : i32
    %c0_i32_1 = arith.constant 0 : i32
    %c0_i32_2 = arith.constant 0 : i32
    return %c0_i32, %c0_i32_0, %c0_i32_1 : i32, i32, i32
  }
  func.func @transform_5(%arg0: i32) -> (i32, i32) {
    %c0_i32 = arith.constant 0 : i32
    %c0_i32_0 = arith.constant 0 : i32
    %c0_i32_1 = arith.constant 0 : i32
    return %c0_i32, %c0_i32_0 : i32, i32
  }
  func.func @transform_6(%arg0: i32) -> (i32, i32) {
    %c0_i32 = arith.constant 0 : i32
    %c0_i32_0 = arith.constant 0 : i32
    return %arg0, %c0_i32 : i32, i32
  }
}

</mosaic_0001>

<llo_original>
// kernel: tpu_custom_call.1
$region0: #{tpu_custom_call.1}
  #allocation0 [shape = 'u32[]', space=smem, size = 0x4, offset = 0x4, fixed_abs, tag = 'smem constant byte address 0x4 - core index']
  #allocation1 [shape = 'u32[144,128]{1,0:T(1,128)}', space=vmem, size = 0x12000, scoped, tag = 'internal scratch']
  %s0 = inlined_call_operand.hbm [shape: bf16[8,12], index: 0, kind: input, shape index: {}]
  %s1 = inlined_call_operand.vmem [shape: bf16[8,4], index: 1, kind: input, shape index: {}]
  %s2 = inlined_call_operand.vmem [shape: bf16[12,128], index: 2, kind: input, shape index: {}]
  %s3 = inlined_call_operand.hbm [shape: bf16[4,128], index: 3, kind: input, shape index: {}]
  %s4 = inlined_call_operand.hbm [shape: bf16[4,128,128], index: 4, kind: input, shape index: {}]
  %s5 = inlined_call_operand.vmem [shape: f32[5,128], index: 5, kind: input, shape index: {}]
  %s6 = inlined_call_operand.vmem [shape: f32[8,1], index: 6, kind: output, shape index: {}]
  %s7 = sld [smem:[#allocation0]]
  $region46: #{tpu_custom_call.1} parent=0
    _
  %s9 = ssub.s32 1, %s7
  %s10 = scalar_select 0, %s9, %s7
  $region1: #{tpu_custom_call.1} parent=0
    #allocation2 [shape = 'u8[2048]{0}', space=vmem, size = 0x800, scoped, tag = 'input window, operand 0, single buffered']
    #allocation3 [shape = 's32[1]{0}', space=sflag, size = 0x4, scoped, tag = 'scoped memory for tpu_custom_call.1']
    #allocation4 [shape = 'u8[1024]{0}', space=vmem, size = 0x400, scoped, tag = 'input window, operand 3, single buffered']
    #allocation5 [shape = 's32[1]{0}', space=sflag, size = 0x4, scoped, tag = 'scoped memory for tpu_custom_call.1']
    #allocation6 [shape = 'u8[131072]{0}', space=vmem, size = 0x20000, scoped, tag = 'input window, operand 4, single buffered']
    %11 = vsyncpa [#allocation3], 0
    %12 = vsyncpa [#allocation5], 0
    // Predicated region
    $region2: #{tpu_custom_call.1} parent=1 // pred_check
      _
    $region3: #{tpu_custom_call.1} parent=1 // pred_check_branch
      %14 = sbr.rel (0) target = $region5
    $region4: #{tpu_custom_call.1} parent=1 // pred_region
      %s16 = ssub.s32 64, 64
      %17 = vsyncadd [#allocation3], %s16
      %s19 = sshll.u32 [#allocation2], 4
      %s20 = int_to_ptr.vmem [resolvable:$true] %s19
      %22 = dma.hbm_to_vmem [thread:$0]  %s0, 64, %s20, [#allocation3]
    $region5: #{tpu_custom_call.1} parent=1 // pred_fallthru
      _
    // Predicated region
    $region6: #{tpu_custom_call.1} parent=1 // pred_check
      _
    $region7: #{tpu_custom_call.1} parent=1 // pred_check_branch
      %24 = sbr.rel (0) target = $region9
    $region8: #{tpu_custom_call.1} parent=1 // pred_region
      _
    $region9: #{tpu_custom_call.1} parent=1 // pred_fallthru
      _
    // Predicated region
    $region10: #{tpu_custom_call.1} parent=1 // pred_check
      _
    $region11: #{tpu_custom_call.1} parent=1 // pred_check_branch
      %26 = sbr.rel (0) target = $region13
    $region12: #{tpu_custom_call.1} parent=1 // pred_region
      _
    $region13: #{tpu_custom_call.1} parent=1 // pred_fallthru
      _
    // Predicated region
    $region14: #{tpu_custom_call.1} parent=1 // pred_check
      _
    $region15: #{tpu_custom_call.1} parent=1 // pred_check_branch
      %28 = sbr.rel (0) target = $region17
    $region16: #{tpu_custom_call.1} parent=1 // pred_region
      %s30 = ssub.s32 32, 32
      %31 = vsyncadd [#allocation5], %s30
      %s33 = sshll.u32 [#allocation4], 4
      %s34 = int_to_ptr.vmem [resolvable:$true] %s33
      %36 = dma.hbm_to_vmem [thread:$0]  %s3, 32, %s34, [#allocation5]
    $region17: #{tpu_custom_call.1} parent=1 // pred_fallthru
      _
    // Predicated region
    $region18: #{tpu_custom_call.1} parent=1 // pred_check
      _
    $region19: #{tpu_custom_call.1} parent=1 // pred_check_branch
      %38 = sbr.rel (0) target = $region21
    $region20: #{tpu_custom_call.1} parent=1 // pred_region
      %s40 = ssub.s32 4096, 4096
      %41 = vsyncadd [#allocation5], %s40
      %s42 = sshll.u32 [#allocation6], 4
      %s43 = int_to_ptr.vmem [resolvable:$true] %s42
      %48 = dma.hbm_to_vmem [thread:$0]  %s4, 4096, %s43, [#allocation5], 64, 64, 4
    $region21: #{tpu_custom_call.1} parent=1 // pred_fallthru
      _
    // Predicated region
    $region22: #{tpu_custom_call.1} parent=1 // pred_check
      _
    $region23: #{tpu_custom_call.1} parent=1 // pred_check_branch
      %50 = sbr.rel (0) target = $region25
    $region24: #{tpu_custom_call.1} parent=1 // pred_region
      _
    $region25: #{tpu_custom_call.1} parent=1 // pred_fallthru
      _
    // Predicated region
    $region26: #{tpu_custom_call.1} parent=1 // pred_check
      _
    $region27: #{tpu_custom_call.1} parent=1 // pred_check_branch
      %52 = sbr.rel (0) target = $region29
    $region28: #{tpu_custom_call.1} parent=1 // pred_region
      %53 = dma.done [#allocation3], 64
    $region29: #{tpu_custom_call.1} parent=1 // pred_fallthru
      _
    // Predicated region
    $region30: #{tpu_custom_call.1} parent=1 // pred_check
      _
    $region31: #{tpu_custom_call.1} parent=1 // pred_check_branch
      %55 = sbr.rel (0) target = $region33
    $region32: #{tpu_custom_call.1} parent=1 // pred_region
      %56 = dma.done [#allocation5], 32
    $region33: #{tpu_custom_call.1} parent=1 // pred_fallthru
      _
    // Predicated region
    $region34: #{tpu_custom_call.1} parent=1 // pred_check
      _
    $region35: #{tpu_custom_call.1} parent=1 // pred_check_branch
      %58 = sbr.rel (0) target = $region37
    $region36: #{tpu_custom_call.1} parent=1 // pred_region
      %59 = dma.done [#allocation5], 4096
    $region37: #{tpu_custom_call.1} parent=1 // pred_fallthru
      _
    %v61 = vld [vmem:[#allocation2] sm:$0xf]
    %v62 = vld [vmem:[%s2] sm:$0xf]
    %v63 = vld [vmem:[%s2 + $0x4] sm:$0x3]
    %v64 = vld [vmem:[%s1] sm:$0xf]
    %v65 = vld [vmem:[#allocation4] sm:$0x3]
    %vm66 = vcmask 31744
    %v68 = vsel %vm66, %v64, 0
    %vm70 = vcmask 1041408
    %v72 = vsel %vm70, %v65, 0
    %74 = vmatprep.subr.bf16.mxu0 0
    %75 = vmatpush1.bf16.msra.mxu0 %v72
    %76 = vmatprep.subr.bf16.mxu0 0
    %77 = vmatpush1.bf16.msra.mxu0 0
    %78 = vmatprep.subr.bf16.mxu0 0
    %79 = vmatpush1.bf16.msra.mxu0 0
    %80 = vmatprep.subr.bf16.mxu0 0
    %81 = vmatpush1.bf16.msra.mxu0 0
    %82 = vmatprep.subr.bf16.mxu0 0
    %83 = vmatpush1.bf16.msra.mxu0 0
    %84 = vmatprep.subr.bf16.mxu0 0
    %85 = vmatpush1.bf16.msra.mxu0 0
    %86 = vmatprep.subr.bf16.mxu0 0
    %87 = vmatpush1.bf16.msra.mxu0 0
    %88 = vmatprep.subr.bf16.mxu0 0
    %89 = vmatpush1.bf16.msra.mxu0 0
    %90 = vmatprep.subr.bf16.mxu0 0
    %91 = vmatpush1.bf16.msra.mxu0 0
    %92 = vmatprep.subr.bf16.mxu0 0
    %93 = vmatpush1.bf16.msra.mxu0 0
    %94 = vmatprep.subr.bf16.mxu0 0
    %95 = vmatpush1.bf16.msra.mxu0 0
    %96 = vmatprep.subr.bf16.mxu0 0
    %97 = vmatpush1.bf16.msra.mxu0 0
    %98 = vmatprep.subr.bf16.mxu0 0
    %99 = vmatpush1.bf16.msra.mxu0 0
    %100 = vmatprep.subr.bf16.mxu0 0
    %101 = vmatpush1.bf16.msra.mxu0 0
    %102 = vmatprep.subr.bf16.mxu0 0
    %103 = vmatpush1.bf16.msra.mxu0 0
    %104 = vmatprep.subr.bf16.mxu0 0
    %105 = vmatpush1.bf16.msra.mxu0 0
    %106 = vmatprep.mubr.bf16.mxu0 0
    %107 = vmatmul.mubr.bf16.gmra.mrb[0].mxu0 %v68
    %v108 = vpop.f32.mrb[0].mxu0
    %v109 = vadd.f32 0.0, %v108
    %v110 = vpop.f32.mrb[0].mxu0
    %v111 = vpop.f32.mrb[0].mxu0
    %v112 = vpop.f32.mrb[0].mxu0
    %113 = vdwg.mxu0
    %v116 = vunpack.c.l.b16 %v62
    %v117 = vunpack.c.l.b16 %v63
    %v118 = vpack.c.b16 %v117, %v116
    %vm119 = vcmask 97280
    %v121 = vsel %vm119, %v61, 0
    %vm123 = vcmask 1045504
    %v125 = vsel %vm123, %v118, 0
    %127 = vmatprep.subr.bf16.mxu0 0
    %128 = vmatpush1.bf16.msra.mxu0 %v125
    %129 = vmatprep.subr.bf16.mxu0 0
    %130 = vmatpush1.bf16.msra.mxu0 0
    %131 = vmatprep.subr.bf16.mxu0 0
    %132 = vmatpush1.bf16.msra.mxu0 0
    %133 = vmatprep.subr.bf16.mxu0 0
    %134 = vmatpush1.bf16.msra.mxu0 0
    %135 = vmatprep.subr.bf16.mxu0 0
    %136 = vmatpush1.bf16.msra.mxu0 0
    %137 = vmatprep.subr.bf16.mxu0 0
    %138 = vmatpush1.bf16.msra.mxu0 0
    %139 = vmatprep.subr.bf16.mxu0 0
    %140 = vmatpush1.bf16.msra.mxu0 0
    %141 = vmatprep.subr.bf16.mxu0 0
    %142 = vmatpush1.bf16.msra.mxu0 0
    %143 = vmatprep.subr.bf16.mxu0 0
    %144 = vmatpush1.bf16.msra.mxu0 0
    %145 = vmatprep.subr.bf16.mxu0 0
    %146 = vmatpush1.bf16.msra.mxu0 0
    %147 = vmatprep.subr.bf16.mxu0 0
    %148 = vmatpush1.bf16.msra.mxu0 0
    %149 = vmatprep.subr.bf16.mxu0 0
    %150 = vmatpush1.bf16.msra.mxu0 0
    %151 = vmatprep.subr.bf16.mxu0 0
    %152 = vmatpush1.bf16.msra.mxu0 0
    %153 = vmatprep.subr.bf16.mxu0 0
    %154 = vmatpush1.bf16.msra.mxu0 0
    %155 = vmatprep.subr.bf16.mxu0 0
    %156 = vmatpush1.bf16.msra.mxu0 0
    %157 = vmatprep.subr.bf16.mxu0 0
    %158 = vmatpush1.bf16.msra.mxu0 0
    %159 = vmatprep.mubr.bf16.mxu0 0
    %160 = vmatmul.mubr.bf16.gmra.mrb[0].mxu0 %v121
    %v161 = vpop.f32.mrb[0].mxu0
    %v162 = vadd.f32 %v109, %v161
    %v163 = vpop.f32.mrb[0].mxu0
    %v164 = vpop.f32.mrb[0].mxu0
    %v165 = vpop.f32.mrb[0].mxu0
    %166 = vdwg.mxu0
    %v167 = vld [vmem:[%s5] sm:$0x1]
    %v168 = vlaneseq
    %v169 = vshrl.u32 %v168, 7
    %v170 = vsub.s32 0, %v169
    %v171 = vrot.slane %v167, %v170
    %v172 = vadd.f32 %v162, %v171
    %v173 = vmax.f32 %v172, 0.0
    %v174 = vpack.c.bf16 %v173, %v173
    %v175 = vld [vmem:[#allocation6] sm:$0xf]
    %v176 = vld [vmem:[#allocation6 + $0x4] sm:$0xf]
    %v177 = vld [vmem:[#allocation6 + $0x8] sm:$0xf]
    %v178 = vld [vmem:[#allocation6 + $0xc] sm:$0xf]
    %v179 = vld [vmem:[#allocation6 + $0x10] sm:$0xf]
    %v180 = vld [vmem:[#allocation6 + $0x14] sm:$0xf]
    %v181 = vld [vmem:[#allocation6 + $0x18] sm:$0xf]
    %v182 = vld [vmem:[#allocation6 + $0x1c] sm:$0xf]
    %v183 = vld [vmem:[#allocation6 + $0x20] sm:$0xf]
    %v184 = vld [vmem:[#allocation6 + $0x24] sm:$0xf]
    %v185 = vld [vmem:[#allocation6 + $0x28] sm:$0xf]
    %v186 = vld [vmem:[#allocation6 + $0x2c] sm:$0xf]
    %v187 = vld [vmem:[#allocation6 + $0x30] sm:$0xf]
    %v188 = vld [vmem:[#allocation6 + $0x34] sm:$0xf]
    %v189 = vld [vmem:[#allocation6 + $0x38] sm:$0xf]
    %v190 = vld [vmem:[#allocation6 + $0x3c] sm:$0xf]
    %v191 = vld [vmem:[%s5 + $0x1] sm:$0x1]
    %v192 = vlaneseq
    %v193 = vshrl.u32 %v192, 7
    %v194 = vsub.s32 0, %v193
    %v195 = vrot.slane %v191, %v194
    %v212 = vunpack.c.l.b16 %v175
    %v213 = vunpack.c.l.b16 %v176
    %v214 = vunpack.c.l.b16 %v177
    %v215 = vunpack.c.l.b16 %v178
    %v216 = vunpack.c.l.b16 %v179
    %v217 = vunpack.c.l.b16 %v180
    %v218 = vunpack.c.l.b16 %v181
    %v219 = vunpack.c.l.b16 %v182
    %v220 = vunpack.c.l.b16 %v183
    %v221 = vunpack.c.l.b16 %v184
    %v222 = vunpack.c.l.b16 %v185
    %v223 = vunpack.c.l.b16 %v186
    %v224 = vunpack.c.l.b16 %v187
    %v225 = vunpack.c.l.b16 %v188
    %v226 = vunpack.c.l.b16 %v189
    %v227 = vunpack.c.l.b16 %v190
    %v228 = vpack.c.b16 %v213, %v212
    %v229 = vpack.c.b16 %v215, %v214
    %v230 = vpack.c.b16 %v217, %v216
    %v231 = vpack.c.b16 %v219, %v218
    %v232 = vpack.c.b16 %v221, %v220
    %v233 = vpack.c.b16 %v223, %v222
    %v234 = vpack.c.b16 %v225, %v224
    %v235 = vpack.c.b16 %v227, %v226
    %244 = vmatprep.subr.bf16.mxu0 0
    %245 = vmatpush1.bf16.msra.mxu0 %v228
    %246 = vmatprep.subr.bf16.mxu0 0
    %247 = vmatpush1.bf16.msra.mxu0 %v229
    %248 = vmatprep.subr.bf16.mxu0 0
    %249 = vmatpush1.bf16.msra.mxu0 %v230
    %250 = vmatprep.subr.bf16.mxu0 0
    %251 = vmatpush1.bf16.msra.mxu0 %v231
    %252 = vmatprep.subr.bf16.mxu0 0
    %253 = vmatpush1.bf16.msra.mxu0 %v232
    %254 = vmatprep.subr.bf16.mxu0 0
    %255 = vmatpush1.bf16.msra.mxu0 %v233
    %256 = vmatprep.subr.bf16.mxu0 0
    %257 = vmatpush1.bf16.msra.mxu0 %v234
    %258 = vmatprep.subr.bf16.mxu0 0
    %259 = vmatpush1.bf16.msra.mxu0 %v235
    %260 = vmatprep.subr.bf16.mxu0 0
    %261 = vmatpush1.bf16.msra.mxu0 0
    %262 = vmatprep.subr.bf16.mxu0 0
    %263 = vmatpush1.bf16.msra.mxu0 0
    %264 = vmatprep.subr.bf16.mxu0 0
    %265 = vmatpush1.bf16.msra.mxu0 0
    %266 = vmatprep.subr.bf16.mxu0 0
    %267 = vmatpush1.bf16.msra.mxu0 0
    %268 = vmatprep.subr.bf16.mxu0 0
    %269 = vmatpush1.bf16.msra.mxu0 0
    %270 = vmatprep.subr.bf16.mxu0 0
    %271 = vmatpush1.bf16.msra.mxu0 0
    %272 = vmatprep.subr.bf16.mxu0 0
    %273 = vmatpush1.bf16.msra.mxu0 0
    %274 = vmatprep.subr.bf16.mxu0 0
    %275 = vmatpush1.bf16.msra.mxu0 0
    %276 = vmatprep.mubr.bf16.mxu0 0
    %277 = vmatmul.mubr.bf16.gmra.mrb[0].mxu0 %v174
    %v278 = vpop.f32.mrb[0].mxu0
    %v279 = vadd.f32 %v195, %v278
    %v280 = vpop.f32.mrb[0].mxu0
    %v281 = vpop.f32.mrb[0].mxu0
    %v282 = vpop.f32.mrb[0].mxu0
    %283 = vdwg.mxu0
    %v284 = vadd.f32 %v279, %v173
    %v285 = vmax.f32 %v284, 0.0
    %v286 = vpack.c.bf16 %v285, %v285
    %s287 = scalar_lea.vmem [#allocation6], 64
    %v288 = vld [vmem:[%s287] sm:$0xf]
    %v289 = vld [vmem:[%s287 + $0x4] sm:$0xf]
    %v290 = vld [vmem:[%s287 + $0x8] sm:$0xf]
    %v291 = vld [vmem:[%s287 + $0xc] sm:$0xf]
    %v292 = vld [vmem:[%s287 + $0x10] sm:$0xf]
    %v293 = vld [vmem:[%s287 + $0x14] sm:$0xf]
    %v294 = vld [vmem:[%s287 + $0x18] sm:$0xf]
    %v295 = vld [vmem:[%s287 + $0x1c] sm:$0xf]
    %v296 = vld [vmem:[%s287 + $0x20] sm:$0xf]
    %v297 = vld [vmem:[%s287 + $0x24] sm:$0xf]
    %v298 = vld [vmem:[%s287 + $0x28] sm:$0xf]
    %v299 = vld [vmem:[%s287 + $0x2c] sm:$0xf]
    %v300 = vld [vmem:[%s287 + $0x30] sm:$0xf]
    %v301 = vld [vmem:[%s287 + $0x34] sm:$0xf]
    %v302 = vld [vmem:[%s287 + $0x38] sm:$0xf]
    %v303 = vld [vmem:[%s287 + $0x3c] sm:$0xf]
    %v304 = vld [vmem:[%s5 + $0x2] sm:$0x1]
    %v305 = vlaneseq
    %v306 = vshrl.u32 %v305, 7
    %v307 = vsub.s32 0, %v306
    %v308 = vrot.slane %v304, %v307
    %v325 = vunpack.c.l.b16 %v288
    %v326 = vunpack.c.l.b16 %v289
    %v327 = vunpack.c.l.b16 %v290
    %v328 = vunpack.c.l.b16 %v291
    %v329 = vunpack.c.l.b16 %v292
    %v330 = vunpack.c.l.b16 %v293
    %v331 = vunpack.c.l.b16 %v294
    %v332 = vunpack.c.l.b16 %v295
    %v333 = vunpack.c.l.b16 %v296
    %v334 = vunpack.c.l.b16 %v297
    %v335 = vunpack.c.l.b16 %v298
    %v336 = vunpack.c.l.b16 %v299
    %v337 = vunpack.c.l.b16 %v300
    %v338 = vunpack.c.l.b16 %v301
    %v339 = vunpack.c.l.b16 %v302
    %v340 = vunpack.c.l.b16 %v303
    %v341 = vpack.c.b16 %v326, %v325
    %v342 = vpack.c.b16 %v328, %v327
    %v343 = vpack.c.b16 %v330, %v329
    %v344 = vpack.c.b16 %v332, %v331
    %v345 = vpack.c.b16 %v334, %v333
    %v346 = vpack.c.b16 %v336, %v335
    %v347 = vpack.c.b16 %v338, %v337
    %v348 = vpack.c.b16 %v340, %v339
    %357 = vmatprep.subr.bf16.mxu0 0
    %358 = vmatpush1.bf16.msra.mxu0 %v341
    %359 = vmatprep.subr.bf16.mxu0 0
    %360 = vmatpush1.bf16.msra.mxu0 %v342
    %361 = vmatprep.subr.bf16.mxu0 0
    %362 = vmatpush1.bf16.msra.mxu0 %v343
    %363 = vmatprep.subr.bf16.mxu0 0
    %364 = vmatpush1.bf16.msra.mxu0 %v344
    %365 = vmatprep.subr.bf16.mxu0 0
    %366 = vmatpush1.bf16.msra.mxu0 %v345
    %367 = vmatprep.subr.bf16.mxu0 0
    %368 = vmatpush1.bf16.msra.mxu0 %v346
    %369 = vmatprep.subr.bf16.mxu0 0
    %370 = vmatpush1.bf16.msra.mxu0 %v347
    %371 = vmatprep.subr.bf16.mxu0 0
    %372 = vmatpush1.bf16.msra.mxu0 %v348
    %373 = vmatprep.subr.bf16.mxu0 0
    %374 = vmatpush1.bf16.msra.mxu0 0
    %375 = vmatprep.subr.bf16.mxu0 0
    %376 = vmatpush1.bf16.msra.mxu0 0
    %377 = vmatprep.subr.bf16.mxu0 0
    %378 = vmatpush1.bf16.msra.mxu0 0
    %379 = vmatprep.subr.bf16.mxu0 0
    %380 = vmatpush1.bf16.msra.mxu0 0
    %381 = vmatprep.subr.bf16.mxu0 0
    %382 = vmatpush1.bf16.msra.mxu0 0
    %383 = vmatprep.subr.bf16.mxu0 0
    %384 = vmatpush1.bf16.msra.mxu0 0
    %385 = vmatprep.subr.bf16.mxu0 0
    %386 = vmatpush1.bf16.msra.mxu0 0
    %387 = vmatprep.subr.bf16.mxu0 0
    %388 = vmatpush1.bf16.msra.mxu0 0
    %389 = vmatprep.mubr.bf16.mxu0 0
    %390 = vmatmul.mubr.bf16.gmra.mrb[0].mxu0 %v286
    %v391 = vpop.f32.mrb[0].mxu0
    %v392 = vadd.f32 %v308, %v391
    %v393 = vpop.f32.mrb[0].mxu0
    %v394 = vpop.f32.mrb[0].mxu0
    %v395 = vpop.f32.mrb[0].mxu0
    %396 = vdwg.mxu0
    %v397 = vadd.f32 %v392, %v285
    %v398 = vmax.f32 %v397, 0.0
    %v399 = vpack.c.bf16 %v398, %v398
    %s400 = scalar_lea.vmem [#allocation6], 128
    %v401 = vld [vmem:[%s400] sm:$0xf]
    %v402 = vld [vmem:[%s400 + $0x4] sm:$0xf]
    %v403 = vld [vmem:[%s400 + $0x8] sm:$0xf]
    %v404 = vld [vmem:[%s400 + $0xc] sm:$0xf]
    %v405 = vld [vmem:[%s400 + $0x10] sm:$0xf]
    %v406 = vld [vmem:[%s400 + $0x14] sm:$0xf]
    %v407 = vld [vmem:[%s400 + $0x18] sm:$0xf]
    %v408 = vld [vmem:[%s400 + $0x1c] sm:$0xf]
    %v409 = vld [vmem:[%s400 + $0x20] sm:$0xf]
    %v410 = vld [vmem:[%s400 + $0x24] sm:$0xf]
    %v411 = vld [vmem:[%s400 + $0x28] sm:$0xf]
    %v412 = vld [vmem:[%s400 + $0x2c] sm:$0xf]
    %v413 = vld [vmem:[%s400 + $0x30] sm:$0xf]
    %v414 = vld [vmem:[%s400 + $0x34] sm:$0xf]
    %v415 = vld [vmem:[%s400 + $0x38] sm:$0xf]
    %v416 = vld [vmem:[%s400 + $0x3c] sm:$0xf]
    %v417 = vld [vmem:[%s5 + $0x3] sm:$0x1]
    %v418 = vlaneseq
    %v419 = vshrl.u32 %v418, 7
    %v420 = vsub.s32 0, %v419
    %v421 = vrot.slane %v417, %v420
    %v438 = vunpack.c.l.b16 %v401
    %v439 = vunpack.c.l.b16 %v402
    %v440 = vunpack.c.l.b16 %v403
    %v441 = vunpack.c.l.b16 %v404
    %v442 = vunpack.c.l.b16 %v405
    %v443 = vunpack.c.l.b16 %v406
    %v444 = vunpack.c.l.b16 %v407
    %v445 = vunpack.c.l.b16 %v408
    %v446 = vunpack.c.l.b16 %v409
    %v447 = vunpack.c.l.b16 %v410
    %v448 = vunpack.c.l.b16 %v411
    %v449 = vunpack.c.l.b16 %v412
    %v450 = vunpack.c.l.b16 %v413
    %v451 = vunpack.c.l.b16 %v414
    %v452 = vunpack.c.l.b16 %v415
    %v453 = vunpack.c.l.b16 %v416
    %v454 = vpack.c.b16 %v439, %v438
    %v455 = vpack.c.b16 %v441, %v440
    %v456 = vpack.c.b16 %v443, %v442
    %v457 = vpack.c.b16 %v445, %v444
    %v458 = vpack.c.b16 %v447, %v446
    %v459 = vpack.c.b16 %v449, %v448
    %v460 = vpack.c.b16 %v451, %v450
    %v461 = vpack.c.b16 %v453, %v452
    %470 = vmatprep.subr.bf16.mxu0 0
    %471 = vmatpush1.bf16.msra.mxu0 %v454
    %472 = vmatprep.subr.bf16.mxu0 0
    %473 = vmatpush1.bf16.msra.mxu0 %v455
    %474 = vmatprep.subr.bf16.mxu0 0
    %475 = vmatpush1.bf16.msra.mxu0 %v456
    %476 = vmatprep.subr.bf16.mxu0 0
    %477 = vmatpush1.bf16.msra.mxu0 %v457
    %478 = vmatprep.subr.bf16.mxu0 0
    %479 = vmatpush1.bf16.msra.mxu0 %v458
    %480 = vmatprep.subr.bf16.mxu0 0
    %481 = vmatpush1.bf16.msra.mxu0 %v459
    %482 = vmatprep.subr.bf16.mxu0 0
    %483 = vmatpush1.bf16.msra.mxu0 %v460
    %484 = vmatprep.subr.bf16.mxu0 0
    %485 = vmatpush1.bf16.msra.mxu0 %v461
    %486 = vmatprep.subr.bf16.mxu0 0
    %487 = vmatpush1.bf16.msra.mxu0 0
    %488 = vmatprep.subr.bf16.mxu0 0
    %489 = vmatpush1.bf16.msra.mxu0 0
    %490 = vmatprep.subr.bf16.mxu0 0
    %491 = vmatpush1.bf16.msra.mxu0 0
    %492 = vmatprep.subr.bf16.mxu0 0
    %493 = vmatpush1.bf16.msra.mxu0 0
    %494 = vmatprep.subr.bf16.mxu0 0
    %495 = vmatpush1.bf16.msra.mxu0 0
    %496 = vmatprep.subr.bf16.mxu0 0
    %497 = vmatpush1.bf16.msra.mxu0 0
    %498 = vmatprep.subr.bf16.mxu0 0
    %499 = vmatpush1.bf16.msra.mxu0 0
    %500 = vmatprep.subr.bf16.mxu0 0
    %501 = vmatpush1.bf16.msra.mxu0 0
    %502 = vmatprep.mubr.bf16.mxu0 0
    %503 = vmatmul.mubr.bf16.gmra.mrb[0].mxu0 %v399
    %v504 = vpop.f32.mrb[0].mxu0
    %v505 = vadd.f32 %v421, %v504
    %v506 = vpop.f32.mrb[0].mxu0
    %v507 = vpop.f32.mrb[0].mxu0
    %v508 = vpop.f32.mrb[0].mxu0
    %509 = vdwg.mxu0
    %v510 = vadd.f32 %v505, %v398
    %v511 = vmax.f32 %v510, 0.0
    %v512 = vpack.c.bf16 %v511, %v511
    %s513 = scalar_lea.vmem [#allocation6], 192
    %v514 = vld [vmem:[%s513] sm:$0xf]
    %v515 = vld [vmem:[%s513 + $0x4] sm:$0xf]
    %v516 = vld [vmem:[%s513 + $0x8] sm:$0xf]
    %v517 = vld [vmem:[%s513 + $0xc] sm:$0xf]
    %v518 = vld [vmem:[%s513 + $0x10] sm:$0xf]
    %v519 = vld [vmem:[%s513 + $0x14] sm:$0xf]
    %v520 = vld [vmem:[%s513 + $0x18] sm:$0xf]
    %v521 = vld [vmem:[%s513 + $0x1c] sm:$0xf]
    %v522 = vld [vmem:[%s513 + $0x20] sm:$0xf]
    %v523 = vld [vmem:[%s513 + $0x24] sm:$0xf]
    %v524 = vld [vmem:[%s513 + $0x28] sm:$0xf]
    %v525 = vld [vmem:[%s513 + $0x2c] sm:$0xf]
    %v526 = vld [vmem:[%s513 + $0x30] sm:$0xf]
    %v527 = vld [vmem:[%s513 + $0x34] sm:$0xf]
    %v528 = vld [vmem:[%s513 + $0x38] sm:$0xf]
    %v529 = vld [vmem:[%s513 + $0x3c] sm:$0xf]
    %v530 = vld [vmem:[%s5 + $0x4] sm:$0x1]
    %v531 = vlaneseq
    %v532 = vshrl.u32 %v531, 7
    %v533 = vsub.s32 0, %v532
    %v534 = vrot.slane %v530, %v533
    %v551 = vunpack.c.l.b16 %v514
    %v552 = vunpack.c.l.b16 %v515
    %v553 = vunpack.c.l.b16 %v516
    %v554 = vunpack.c.l.b16 %v517
    %v555 = vunpack.c.l.b16 %v518
    %v556 = vunpack.c.l.b16 %v519
    %v557 = vunpack.c.l.b16 %v520
    %v558 = vunpack.c.l.b16 %v521
    %v559 = vunpack.c.l.b16 %v522
    %v560 = vunpack.c.l.b16 %v523
    %v561 = vunpack.c.l.b16 %v524
    %v562 = vunpack.c.l.b16 %v525
    %v563 = vunpack.c.l.b16 %v526
    %v564 = vunpack.c.l.b16 %v527
    %v565 = vunpack.c.l.b16 %v528
    %v566 = vunpack.c.l.b16 %v529
    %v567 = vpack.c.b16 %v552, %v551
    %v568 = vpack.c.b16 %v554, %v553
    %v569 = vpack.c.b16 %v556, %v555
    %v570 = vpack.c.b16 %v558, %v557
    %v571 = vpack.c.b16 %v560, %v559
    %v572 = vpack.c.b16 %v562, %v561
    %v573 = vpack.c.b16 %v564, %v563
    %v574 = vpack.c.b16 %v566, %v565
    %583 = vmatprep.subr.bf16.mxu0 0
    %584 = vmatpush1.bf16.msra.mxu0 %v567
    %585 = vmatprep.subr.bf16.mxu0 0
    %586 = vmatpush1.bf16.msra.mxu0 %v568
    %587 = vmatprep.subr.bf16.mxu0 0
    %588 = vmatpush1.bf16.msra.mxu0 %v569
    %589 = vmatprep.subr.bf16.mxu0 0
    %590 = vmatpush1.bf16.msra.mxu0 %v570
    %591 = vmatprep.subr.bf16.mxu0 0
    %592 = vmatpush1.bf16.msra.mxu0 %v571
    %593 = vmatprep.subr.bf16.mxu0 0
    %594 = vmatpush1.bf16.msra.mxu0 %v572
    %595 = vmatprep.subr.bf16.mxu0 0
    %596 = vmatpush1.bf16.msra.mxu0 %v573
    %597 = vmatprep.subr.bf16.mxu0 0
    %598 = vmatpush1.bf16.msra.mxu0 %v574
    %599 = vmatprep.subr.bf16.mxu0 0
    %600 = vmatpush1.bf16.msra.mxu0 0
    %601 = vmatprep.subr.bf16.mxu0 0
    %602 = vmatpush1.bf16.msra.mxu0 0
    %603 = vmatprep.subr.bf16.mxu0 0
    %604 = vmatpush1.bf16.msra.mxu0 0
    %605 = vmatprep.subr.bf16.mxu0 0
    %606 = vmatpush1.bf16.msra.mxu0 0
    %607 = vmatprep.subr.bf16.mxu0 0
    %608 = vmatpush1.bf16.msra.mxu0 0
    %609 = vmatprep.subr.bf16.mxu0 0
    %610 = vmatpush1.bf16.msra.mxu0 0
    %611 = vmatprep.subr.bf16.mxu0 0
    %612 = vmatpush1.bf16.msra.mxu0 0
    %613 = vmatprep.subr.bf16.mxu0 0
    %614 = vmatpush1.bf16.msra.mxu0 0
    %615 = vmatprep.mubr.bf16.mxu0 0
    %616 = vmatmul.mubr.bf16.gmra.mrb[0].mxu0 %v512
    %v617 = vpop.f32.mrb[0].mxu0
    %v618 = vadd.f32 %v534, %v617
    %v619 = vpop.f32.mrb[0].mxu0
    %v620 = vpop.f32.mrb[0].mxu0
    %v621 = vpop.f32.mrb[0].mxu0
    %622 = vdwg.mxu0
    %vm623 = vcmask 7168
    %624 = vst.msk [vmem:[%s6] sm:$0xff] %vm623, %v618
    // Predicated region
    $region38: #{tpu_custom_call.1} parent=1 // pred_check
      _
    $region39: #{tpu_custom_call.1} parent=1 // pred_check_branch
      %626 = sbr.rel (0) target = $region41
    $region40: #{tpu_custom_call.1} parent=1 // pred_region
      _
    $region41: #{tpu_custom_call.1} parent=1 // pred_fallthru
      _
    // Predicated region
    $region42: #{tpu_custom_call.1} parent=1 // pred_check
      _
    $region43: #{tpu_custom_call.1} parent=1 // pred_check_branch
      %628 = sbr.rel (0) target = $region45
    $region44: #{tpu_custom_call.1} parent=1 // pred_region
      _
    $region45: #{tpu_custom_call.1} parent=1 // pred_fallthru
      _
    %629 = vsyncpa [#allocation3], 1
    %630 = vsyncpa [#allocation5], 1

</llo_original>
